<compile_context>
chip_gen: v7x
topology: tpu7x:2x2x1
jax: 0.10.0
libtpu: 0.0.40
codegen_flags: <defaults>
</compile_context>

<pallas_src>
import functools

import jax
import jax.numpy as jnp
from jax.experimental import pallas as pl
from jax.experimental.pallas import tpu as pltpu


def _round_up(x: int, m: int) -> int:
    return (x + m - 1) // m * m


def _pick_tile(dim: int, max_tile: int, granule: int, min_tile: int) -> int:
    """Pick a tile size for one dimension.

    `dim` is rounded to `granule`. If it fits in a single tile (<= max_tile),
    return it exactly (zero padding waste). Otherwise choose, among the
    power-of-two ladder {max_tile, max_tile/2, ...} down to `min_tile`, the
    tile whose padded total is smallest (ties go to the larger tile), so
    padding never costs more than one tile row/column.
    """
    dim = _round_up(dim, granule)
    max_tile = _round_up(min(max_tile, dim), granule)
    if dim <= max_tile:
        return dim
    lo = max(granule, min(min_tile, dim))
    best_t, best_pad = None, None
    t = max_tile
    while t >= lo:
        t_al = _round_up(t, granule)
        padded = _round_up(dim, t_al)
        if best_pad is None or padded < best_pad:
            best_t, best_pad = t_al, padded
        t //= 2
    return best_t if best_t is not None else _round_up(lo, granule)


# ----------------------------- kernels --------------------------------------

def _linear_kernel_single_k(x_ref, w_ref, b_ref, o_ref):
    # Single K step: no accumulator, no phase gating; purely parallel grid.
    acc = jnp.dot(x_ref[...], w_ref[...], preferred_element_type=jnp.float32)
    o_ref[...] = (acc + b_ref[...]).astype(o_ref.dtype)


def _linear_kernel_acc_into_out(x_ref, w_ref, b_ref, o_ref):
    # f32 output is resident across the K axis: accumulate in place, no scratch.
    k = pl.program_id(2)

    @pl.when(k == 0)
    def _init():
        o_ref[...] = jnp.zeros_like(o_ref)

    o_ref[...] += jnp.dot(x_ref[...], w_ref[...],
                          preferred_element_type=jnp.float32)

    @pl.when(k == pl.num_programs(2) - 1)
    def _finalize():
        o_ref[...] += b_ref[...]


def _linear_kernel_acc_scratch(x_ref, w_ref, b_ref, o_ref, acc_ref):
    # Non-f32 outputs: f32 VMEM accumulator, bias add + cast in the epilogue.
    k = pl.program_id(2)

    @pl.when(k == 0)
    def _init():
        acc_ref[...] = jnp.zeros_like(acc_ref)

    acc_ref[...] += jnp.dot(x_ref[...], w_ref[...],
                            preferred_element_type=jnp.float32)

    @pl.when(k == pl.num_programs(2) - 1)
    def _finalize():
        o_ref[...] = (acc_ref[...] + b_ref[...]).astype(o_ref.dtype)


# ----------------------------- wrapper ---------------------------------------

@functools.partial(jax.jit, static_argnames=("tm", "tn", "tk", "compute_dtype"))
def mlp_forward(x, weight, bias, *, tm=None, tn=None, tk=None, compute_dtype=None):
    """y = x @ weight.T + bias  (PyTorch nn.Linear semantics).

    x:      (B, in_dim)
    weight: (out_dim, in_dim)   -- PyTorch layout
    bias:   (out_dim,)
    compute_dtype: optionally run the matmul in bf16 (f32 accumulate, f32 bias)
        for MXU-native throughput; default keeps the input dtype (exact f32).
    """
    B, K = x.shape
    N = weight.shape[0]

    out_dtype = jnp.dtype(x.dtype)
    cdt = jnp.dtype(compute_dtype) if compute_dtype is not None else out_dtype
    esz = cdt.itemsize
    out_esz = out_dtype.itemsize
    sublane = 8 * (4 // esz) if esz <= 4 else 8   # 8 f32 / 16 bf16 / 32 int8

    # --- lane/sublane-aligned problem sizes ----------------------------------
    Mp0 = _round_up(B, sublane)
    Kp0 = _round_up(K, 128)
    Np0 = _round_up(N, 128)

    # --- generation-aware VMEM budget (v5e/v6e: 128 MiB, v7x: 64 MiB) --------
    try:
        info = pltpu.get_tpu_info()
        vmem_cap = int(getattr(info, "vmem_capacity_bytes", 64 * 1024 * 1024))
    except Exception:
        vmem_cap = 64 * 1024 * 1024                # safe lower bound (v7x)
    budget = (vmem_cap * 3) // 4                   # ~48 MiB v7x, ~96 MiB v5e/v6e

    def footprint(tm_, tn_, tk_, k_steps_):
        use_scratch = (k_steps_ > 1) and (out_dtype != jnp.float32)
        f = 2 * (tm_ * tk_ + tk_ * tn_) * esz      # double-buffered x & w tiles
        f += 2 * tn_ * 4                           # bias (f32)
        f += 2 * tm_ * tn_ * out_esz               # double-buffered output tile
        if use_scratch:
            f += tm_ * tn_ * 4
        return f

    # --- tile selection -------------------------------------------------------
    # 512x512 f32 output tiles give ~256 flops/byte (1024x1024 bf16 ~512):
    # enough arithmetic intensity to be MXU-bound on v5e/v6e/v7x.
    target_mn = 512 if esz >= 4 else 1024
    if tm is None:
        tm = _pick_tile(Mp0, target_mn, sublane, min(128, Mp0))
    if tn is None:
        tn = _pick_tile(Np0, target_mn, 128, min(256, Np0))
    if tk is None:
        if footprint(tm, tn, Kp0, 1) <= budget:
            tk = Kp0                               # single K step: no accumulator
        else:
            tk = _pick_tile(Kp0, 1024, 128, min(512, Kp0))

    def k_steps_for(tk_):
        return _round_up(Kp0, tk_) // tk_

    # Shrink until the double-buffered footprint fits the VMEM budget.
    while footprint(tm, tn, tk, k_steps_for(tk)) > budget:
        if tk >= max(tm, tn) and tk > 128:
            tk = max(128, _round_up(tk // 2, 128))
        elif tn >= tm and tn > 128:
            tn = max(128, _round_up(tn // 2, 128))
        elif tm > sublane:
            tm = max(sublane, _round_up(tm // 2, sublane))
        else:
            break

    Mp = _round_up(Mp0, tm)
    Np = _round_up(Np0, tn)
    Kp = _round_up(Kp0, tk)
    k_steps = Kp // tk

    # v7x megacore: ensure the parallel (i, j) grid has >= 2 tiles so both
    # TensorCores get work on skinny-M shapes (only when alignment permits).
    if (Mp // tm) * (Np // tn) == 1:
        if tn % 256 == 0:
            tn //= 2
        elif tm % (2 * sublane) == 0:
            tm //= 2

    grid_m, grid_n = Mp // tm, Np // tn

    # --- pad + one-time weight transpose (fused by XLA) -----------------------
    # Presenting the weight as (K, N) keeps the in-kernel contraction in plain
    # (M,K)x(K,N) form, so no per-K-step XLU transpose competes with vmatmul
    # for the vector-extended issue slots; the single transpose is amortized
    # across the whole grid (and across calls when weights are reused).
    x_c = x.astype(cdt) if x.dtype != cdt else x
    w_c = weight.astype(cdt) if weight.dtype != cdt else weight
    w_t = w_c.T                                    # (K, N)
    x_p = jnp.pad(x_c, ((0, Mp - B), (0, Kp - K))) if (Mp != B or Kp != K) else x_c
    w_p = jnp.pad(w_t, ((0, Kp - K), (0, Np - N))) if (Kp != K or Np != N) else w_t
    b_p = bias.astype(jnp.float32).reshape(1, N)
    if Np != N:
        b_p = jnp.pad(b_p, ((0, 0), (0, Np - N)))

    cost = pl.CostEstimate(
        flops=2 * Mp * Np * Kp,
        bytes_accessed=Mp * Kp * esz + Kp * Np * esz + Np * 4 + Mp * Np * out_esz,
        transcendentals=0,
    )

    if k_steps == 1:
        # Purely parallel 2-D grid.
        grid = (grid_m, grid_n)
        in_specs = [
            pl.BlockSpec((tm, tk), lambda i, j: (i, 0)),   # x
            pl.BlockSpec((tk, tn), lambda i, j: (0, j)),   # weight (K, N)
            pl.BlockSpec((1, tn), lambda i, j: (0, j)),    # bias
        ]
        out_specs = pl.BlockSpec((tm, tn), lambda i, j: (i, j))
        kernel = _linear_kernel_single_k
        scratch_shapes = []
        semantics = ("parallel", "parallel")
    else:
        grid = (grid_m, grid_n, k_steps)
        x_spec = pl.BlockSpec((tm, tk), lambda i, j, k: (i, k))
        w_map = lambda i, j, k: (k, j)
        # Skinny-M streaming shapes are DMA-latency sensitive: deepen the
        # weight pipeline if VMEM headroom allows.
        if grid_m == 1 and footprint(tm, tn, tk, k_steps) + tk * tn * esz <= budget:
            w_spec = pl.BlockSpec((tk, tn), w_map, pipeline_mode=pl.Buffered(3))
        else:
            w_spec = pl.BlockSpec((tk, tn), w_map)
        b_spec = pl.BlockSpec((1, tn), lambda i, j, k: (0, j))
        out_specs = pl.BlockSpec((tm, tn), lambda i, j, k: (i, j))
        in_specs = [x_spec, w_spec, b_spec]
        if out_dtype == jnp.float32:
            kernel = _linear_kernel_acc_into_out   # accumulate into resident o_ref
            scratch_shapes = []
        else:
            kernel = _linear_kernel_acc_scratch    # f32 scratch + cast epilogue
            scratch_shapes = [pltpu.VMEM((tm, tn), jnp.float32)]
        semantics = ("parallel", "parallel", "arbitrary")

    y_p = pl.pallas_call(
        kernel,
        out_shape=jax.ShapeDtypeStruct((Mp, Np), out_dtype),
        grid_spec=pltpu.PrefetchScalarGridSpec(
            num_scalar_prefetch=0,
            grid=grid,
            in_specs=in_specs,
            out_specs=out_specs,
            scratch_shapes=scratch_shapes,
        ),
        compiler_params=pltpu.CompilerParams(
            dimension_semantics=semantics,
            vmem_limit_bytes=int(budget),
        ),
        cost_estimate=cost,
    )(x_p, w_p, b_p)

    # Padding rows/cols are exact zeros / unused; slice out the valid region.
    if Mp == B and Np == N:
        return y_p
    return y_p[:B, :N]


if __name__ == "__main__":
    key = jax.random.PRNGKey(0)
    kx, kw, kb = jax.random.split(key, 3)

    # Small shapes consistent with the module's forward (nn.Linear(in, out)).
    batch, in_dim, out_dim = 8, 32, 16

    x = jax.random.normal(kx, (batch, in_dim), dtype=jnp.float32)
    # Deterministic init mimicking nn.Linear's uniform(-1/sqrt(in), 1/sqrt(in)).
    bound = 1.0 / (in_dim ** 0.5)
    weight = jax.random.uniform(kw, (out_dim, in_dim), jnp.float32,
                                minval=-bound, maxval=bound)
    bias = jax.random.uniform(kb, (out_dim,), jnp.float32,
                              minval=-bound, maxval=bound)

    y = mlp_forward(x, weight, bias)
    jax.block_until_ready(y)

    # Cross-check against plain JAX reference (PyTorch nn.Linear semantics).
    y_ref = x @ weight.T + bias
    assert y.shape == y_ref.shape, "shape mismatch vs reference"
    assert jnp.allclose(y, y_ref, atol=1e-4, rtol=1e-4), "mismatch vs reference"

    print("KERNEL_OK")
</pallas_src>

<mosaic_0001>
module attributes {stable_mosaic.version = 11 : i64} {
  func.func @_linear_kernel_single_k(%arg0: i32, %arg1: i32, %arg2: memref<8x128xf32, #tpu.memory_space<vmem>>, %arg3: memref<128x128xf32, #tpu.memory_space<vmem>>, %arg4: memref<1x128xf32, #tpu.memory_space<vmem>>, %arg5: memref<8x128xf32, #tpu.memory_space<vmem>>) attributes {dimension_semantics = [#tpu.dimension_semantics<parallel>, #tpu.dimension_semantics<parallel>], iteration_bounds = array<i64: 1, 1>, scalar_prefetch = 0 : i64, scratch_operands = 0 : i64, tpu.core_type = #tpu.core_type<tc>, window_params = [{transform_indices = @transform_0, window_bounds = array<i64: 8, 128>}, {transform_indices = @transform_1, window_bounds = array<i64: 128, 128>}, {transform_indices = @transform_2, window_bounds = array<i64: 1, 128>}, {transform_indices = @transform_3, window_bounds = array<i64: 8, 128>}]} {
    %c0 = arith.constant 0 : index
    %c0_0 = arith.constant 0 : index
    %0 = vector.load %arg2[%c0, %c0_0] : memref<8x128xf32, #tpu.memory_space<vmem>>, vector<8x128xf32>
    %c0_1 = arith.constant 0 : index
    %c0_2 = arith.constant 0 : index
    %1 = vector.load %arg3[%c0_1, %c0_2] : memref<128x128xf32, #tpu.memory_space<vmem>>, vector<128x128xf32>
    %cst = arith.constant dense<0.000000e+00> : vector<8x128xf32>
    %2 = tpu.matmul %0, %1, %cst {dimension_numbers = #tpu.dot_dimension_numbers<[1], [0], [0], [1], [0, 0, 1, 1], [], []>} : vector<8x128xf32>, vector<128x128xf32>, vector<8x128xf32> -> vector<8x128xf32>
    %c0_3 = arith.constant 0 : index
    %c0_4 = arith.constant 0 : index
    %3 = vector.load %arg4[%c0_3, %c0_4] : memref<1x128xf32, #tpu.memory_space<vmem>>, vector<1x128xf32>
    %4 = vector.broadcast %3 : vector<1x128xf32> to vector<8x128xf32>
    %5 = arith.addf %2, %4 : vector<8x128xf32>
    %c0_5 = arith.constant 0 : index
    %c0_6 = arith.constant 0 : index
    %6 = vector.load %arg5[%c0_5, %c0_6] : memref<8x128xf32, #tpu.memory_space<vmem>>, vector<8x128xf32>
    tpu.vector_store %arg5[%c0_5, %c0_6], %5 {strides = array<i32>} : memref<8x128xf32, #tpu.memory_space<vmem>>, vector<8x128xf32>,
    return
  }
  func.func @transform_0(%arg0: i32, %arg1: i32) -> (i32, i32) {
    %c0_i32 = arith.constant 0 : i32
    %c0_i32_0 = arith.constant 0 : i32
    return %arg0, %c0_i32 : i32, i32
  }
  func.func @transform_1(%arg0: i32, %arg1: i32) -> (i32, i32) {
    %c0_i32 = arith.constant 0 : i32
    %c0_i32_0 = arith.constant 0 : i32
    return %c0_i32, %arg1 : i32, i32
  }
  func.func @transform_2(%arg0: i32, %arg1: i32) -> (i32, i32) {
    %c0_i32 = arith.constant 0 : i32
    %c0_i32_0 = arith.constant 0 : i32
    return %c0_i32, %arg1 : i32, i32
  }
  func.func @transform_3(%arg0: i32, %arg1: i32) -> (i32, i32) {
    %c0_i32 = arith.constant 0 : i32
    return %arg0, %arg1 : i32, i32
  }
}

</mosaic_0001>

<llo_original>
// kernel: mlp_forward.1
$region0: #{mlp_forward.1}
  #allocation0 [shape = 'u32[]', space=smem, size = 0x4, offset = 0x4, fixed_abs, tag = 'smem constant byte address 0x4 - core index']
  #allocation1 [shape = 'u32[144,128]{1,0:T(1,128)}', space=vmem, size = 0x12000, scoped, tag = 'internal scratch']
  %s0 = inlined_call_operand.vmem [shape: f32[8,128], index: 0, kind: input, shape index: {}]
  %s1 = inlined_call_operand.vmem [shape: f32[128,128], index: 1, kind: input, shape index: {}]
  %s2 = inlined_call_operand.vmem [shape: f32[1,128], index: 2, kind: input, shape index: {}]
  %s3 = inlined_call_operand.hbm [shape: f32[8,128], index: 3, kind: output, shape index: {}]
  %s4 = sld [smem:[#allocation0]]
  $region22: #{mlp_forward.1} parent=0
    _
  %s6 = ssub.s32 1, %s4
  %s7 = scalar_select 0, %s6, %s4
  $region1: #{mlp_forward.1} parent=0
    #allocation2 [shape = 'u8[4096]{0}', space=vmem, size = 0x1000, scoped, tag = 'output window, operand 0, single buffered']
    #allocation3 [shape = 's32[1]{0}', space=sflag, size = 0x4, scoped, tag = 'scoped memory for mlp_forward.1']
    %8 = vsyncpa [#allocation3], 0
    // Predicated region
    $region2: #{mlp_forward.1} parent=1 // pred_check
      _
    $region3: #{mlp_forward.1} parent=1 // pred_check_branch
      %10 = sbr.rel (0) target = $region5
    $region4: #{mlp_forward.1} parent=1 // pred_region
      _
    $region5: #{mlp_forward.1} parent=1 // pred_fallthru
      _
    // Predicated region
    $region6: #{mlp_forward.1} parent=1 // pred_check
      _
    $region7: #{mlp_forward.1} parent=1 // pred_check_branch
      %12 = sbr.rel (0) target = $region9
    $region8: #{mlp_forward.1} parent=1 // pred_region
      _
    $region9: #{mlp_forward.1} parent=1 // pred_fallthru
      _
    // Predicated region
    $region10: #{mlp_forward.1} parent=1 // pred_check
      _
    $region11: #{mlp_forward.1} parent=1 // pred_check_branch
      %14 = sbr.rel (0) target = $region13
    $region12: #{mlp_forward.1} parent=1 // pred_region
      _
    $region13: #{mlp_forward.1} parent=1 // pred_fallthru
      _
    %v15 = vld [vmem:[%s0] sm:$0xff]
    %v16 = vld [vmem:[%s1] sm:$0xff]
    %v17 = vld [vmem:[%s1 + $0x8] sm:$0xff]
    %v18 = vld [vmem:[%s1 + $0x10] sm:$0xff]
    %v19 = vld [vmem:[%s1 + $0x18] sm:$0xff]
    %v20 = vld [vmem:[%s1 + $0x20] sm:$0xff]
    %v21 = vld [vmem:[%s1 + $0x28] sm:$0xff]
    %v22 = vld [vmem:[%s1 + $0x30] sm:$0xff]
    %v23 = vld [vmem:[%s1 + $0x38] sm:$0xff]
    %v24 = vld [vmem:[%s1 + $0x40] sm:$0xff]
    %v25 = vld [vmem:[%s1 + $0x48] sm:$0xff]
    %v26 = vld [vmem:[%s1 + $0x50] sm:$0xff]
    %v27 = vld [vmem:[%s1 + $0x58] sm:$0xff]
    %v28 = vld [vmem:[%s1 + $0x60] sm:$0xff]
    %v29 = vld [vmem:[%s1 + $0x68] sm:$0xff]
    %v30 = vld [vmem:[%s1 + $0x70] sm:$0xff]
    %v31 = vld [vmem:[%s1 + $0x78] sm:$0xff]
    %v32 = vld [vmem:[%s2] sm:$0x1]
    %v34 = vlaneseq
    %v35 = vshrl.u32 %v34, 7
    %v36 = vsub.s32 0, %v35
    %v37 = vrot.slane %v32, %v36
    %39 = vmatprep.subr.mxu0 0.0
    %40 = vmatpush1.msra.mxu0 %v16
    %41 = vmatprep.subr.mxu0 0.0
    %42 = vmatpush1.msra.mxu0 %v17
    %43 = vmatprep.subr.mxu0 0.0
    %44 = vmatpush1.msra.mxu0 %v18
    %45 = vmatprep.subr.mxu0 0.0
    %46 = vmatpush1.msra.mxu0 %v19
    %47 = vmatprep.subr.mxu0 0.0
    %48 = vmatpush1.msra.mxu0 %v20
    %49 = vmatprep.subr.mxu0 0.0
    %50 = vmatpush1.msra.mxu0 %v21
    %51 = vmatprep.subr.mxu0 0.0
    %52 = vmatpush1.msra.mxu0 %v22
    %53 = vmatprep.subr.mxu0 0.0
    %54 = vmatpush1.msra.mxu0 %v23
    %55 = vmatprep.subr.mxu0 0.0
    %56 = vmatpush1.msra.mxu0 %v24
    %57 = vmatprep.subr.mxu0 0.0
    %58 = vmatpush1.msra.mxu0 %v25
    %59 = vmatprep.subr.mxu0 0.0
    %60 = vmatpush1.msra.mxu0 %v26
    %61 = vmatprep.subr.mxu0 0.0
    %62 = vmatpush1.msra.mxu0 %v27
    %63 = vmatprep.subr.mxu0 0.0
    %64 = vmatpush1.msra.mxu0 %v28
    %65 = vmatprep.subr.mxu0 0.0
    %66 = vmatpush1.msra.mxu0 %v29
    %67 = vmatprep.subr.mxu0 0.0
    %68 = vmatpush1.msra.mxu0 %v30
    %69 = vmatprep.subr.mxu0 0.0
    %70 = vmatpush1.msra.mxu0 %v31
    %71 = vmatprep.subr.mxu0 0.0
    %72 = vmatpush1.msra.mxu0 0.0
    %73 = vmatprep.subr.mxu0 0.0
    %74 = vmatpush1.msra.mxu0 0.0
    %75 = vmatprep.subr.mxu0 0.0
    %76 = vmatpush1.msra.mxu0 0.0
    %77 = vmatprep.subr.mxu0 0.0
    %78 = vmatpush1.msra.mxu0 0.0
    %79 = vmatprep.subr.mxu0 0.0
    %80 = vmatpush1.msra.mxu0 0.0
    %81 = vmatprep.subr.mxu0 0.0
    %82 = vmatpush1.msra.mxu0 0.0
    %83 = vmatprep.subr.mxu0 0.0
    %84 = vmatpush1.msra.mxu0 0.0
    %85 = vmatprep.subr.mxu0 0.0
    %86 = vmatpush1.msra.mxu0 0.0
    %87 = vmatprep.subr.mxu0 0.0
    %88 = vmatpush1.msra.mxu0 0.0
    %89 = vmatprep.subr.mxu0 0.0
    %90 = vmatpush1.msra.mxu0 0.0
    %91 = vmatprep.subr.mxu0 0.0
    %92 = vmatpush1.msra.mxu0 0.0
    %93 = vmatprep.subr.mxu0 0.0
    %94 = vmatpush1.msra.mxu0 0.0
    %95 = vmatprep.subr.mxu0 0.0
    %96 = vmatpush1.msra.mxu0 0.0
    %97 = vmatprep.subr.mxu0 0.0
    %98 = vmatpush1.msra.mxu0 0.0
    %99 = vmatprep.subr.mxu0 0.0
    %100 = vmatpush1.msra.mxu0 0.0
    %101 = vmatprep.subr.mxu0 0.0
    %102 = vmatpush1.msra.mxu0 0.0
    %103 = vmatprep.mubr.f32.mxu0 0.0
    %104 = vmatmul.mubr.f32.gmra.mrb[0].mxu0 %v15
    %v105 = vpop.f32.mrb[0].mxu0
    %v106 = vadd.f32 %v37, %v105
    %v107 = vpop.f32.mrb[0].mxu0
    %108 = vdwg.mxu0
    %109 = vst [vmem:[#allocation2] sm:$0xff] %v106
    // Predicated region
    $region14: #{mlp_forward.1} parent=1 // pred_check
      _
    $region15: #{mlp_forward.1} parent=1 // pred_check_branch
      %111 = sbr.rel (0) target = $region17
    $region16: #{mlp_forward.1} parent=1 // pred_region
      %s113 = ssub.s32 128, 128
      %114 = vsyncadd [#allocation3], %s113
      %s116 = sshll.u32 [#allocation2], 4
      %s117 = int_to_ptr.vmem [resolvable:$true] %s116
      %119 = dma.vmem_to_hbm [thread:$0]  %s117, 128, %s3, [#allocation3]
    $region17: #{mlp_forward.1} parent=1 // pred_fallthru
      _
    // Predicated region
    $region18: #{mlp_forward.1} parent=1 // pred_check
      _
    $region19: #{mlp_forward.1} parent=1 // pred_check_branch
      %121 = sbr.rel (0) target = $region21
    $region20: #{mlp_forward.1} parent=1 // pred_region
      %122 = dma.done [#allocation3], 128
    $region21: #{mlp_forward.1} parent=1 // pred_fallthru
      _
    %123 = vsyncpa [#allocation3], 1

</llo_original>
